<compile_context>
chip_gen: v7x
topology: tpu7x:2x2x1
jax: 0.10.0
libtpu: 0.0.40
codegen_flags: <defaults>
</compile_context>

<pallas_src>
import functools

import jax
import jax.numpy as jnp
from jax.experimental import pallas as pl
from jax.experimental.pallas import tpu as pltpu

EPS = 6.1e-05  # matches norm_layer(4 * in_chans, eps=6.1e-05) in the module


def _round_up(x, m):
    return (x + m - 1) // m * m


def _vmem_capacity_bytes():
    try:
        return int(pltpu.get_tpu_info().vmem_capacity_bytes)
    except Exception:
        return 64 * 1024 * 1024  # conservative (v7x-sized) fallback


def _patch_merge_kernel(x_ref, w_ref, b_ref, o_ref):
    # x_ref: (tm, K)  bf16 merged 2x2 patch features, K = 4*C
    # w_ref: (K, N)   gamma-folded reduction weight (bf16), N = 2*C
    # b_ref: (1, N)   f32 bias row (= beta @ W^T)
    # o_ref: (tm, N)  output tile
    x = x_ref[...].astype(jnp.float32)
    k_inv = 1.0 / x.shape[-1]

    # LayerNorm statistics in f32, single reduction pass (biased variance,
    # like torch.nn.LayerNorm); clamp guards tiny negative cancellation.
    mean = jnp.sum(x, axis=-1, keepdims=True) * k_inv
    mean_sq = jnp.sum(x * x, axis=-1, keepdims=True) * k_inv
    var = jnp.maximum(mean_sq - mean * mean, 0.0)
    xn = (x - mean) * jax.lax.rsqrt(var + EPS)

    # Linear(4C -> 2C, bias=False) with gamma folded into the weight and beta
    # folded into the bias row: bf16 operands on the MXU, f32 accumulation.
    acc = jnp.dot(xn.astype(w_ref.dtype), w_ref[...],
                  preferred_element_type=jnp.float32)
    o_ref[...] = (acc + b_ref[...]).astype(o_ref.dtype)


def _pick_tm(M, K, N, in_bytes, out_bytes, w_bytes, tm_desired, vmem_budget):
    """Largest row tile (multiple of 16, grid >= 2 steps) fitting the budget."""

    def need(tm):
        return (2 * tm * K * in_bytes      # double-buffered input tiles
                + 2 * tm * N * out_bytes   # double-buffered output tiles
                + 2 * K * N * w_bytes      # constant weight block
                + 2 * N * 4)               # constant bias row

    tm = min(_round_up(tm_desired, 16), _round_up(M, 16))
    while tm > 16 and need(tm) > vmem_budget:
        tm = _round_up(tm // 2, 16)
    tm = max(tm, 16)
    # Keep the grid >= 2 steps so both v7x TensorCores get work (the single
    # grid axis is "parallel"); negligible cost on 1-TC v5e/v6e.
    if M >= 32:
        tm = min(tm, _round_up(pl.cdiv(M, 2), 16))
    return tm, need(tm)


@functools.partial(jax.jit,
                   static_argnames=("tm", "matmul_dtype", "out_dtype"))
def patch_merging_forward(x, gamma, beta, weight, *, tm=2048,
                          matmul_dtype=jnp.bfloat16, out_dtype=jnp.float32):
    """x: (B, C, H, W); weight: (2C, 4C) torch nn.Linear layout.

    Returns (B, H//2 * W//2, 2*C) in `out_dtype`, matching PatchMerging.forward.
    """
    B, C, H, W = x.shape
    assert H % 2 == 0 and W % 2 == 0
    K, N = 4 * C, 2 * C
    L = (H // 2) * (W // 2)
    M = B * L

    # ---- single-copy 2x2 merge, emitted directly in the kernel input dtype --
    # merged[(b,h,w), (wp,hp,c)] = x[b, c, 2h+hp, 2w+wp]  == torch's permute +
    # four strided slices + cat, done with one (bf16, half-width) transpose.
    x6 = x.astype(matmul_dtype).reshape(B, C, H // 2, 2, W // 2, 2)
    merged = jnp.transpose(x6, (0, 2, 4, 5, 3, 1)).reshape(M, K)

    # ---- fold the LayerNorm affine into the matmul -------------------------
    # (xn*gamma + beta) @ W^T == xn @ (gamma[:,None] * W^T) + beta @ W^T
    w_t = jnp.transpose(weight).astype(jnp.float32)                 # (K, N)
    w_folded = (gamma.astype(jnp.float32)[:, None] * w_t).astype(matmul_dtype)
    bias_row = beta.astype(jnp.float32)[None, :] @ w_t              # (1, N) f32

    in_bytes = jnp.dtype(matmul_dtype).itemsize
    out_bytes = jnp.dtype(out_dtype).itemsize
    w_bytes = in_bytes

    vmem_cap = _vmem_capacity_bytes()          # 64 MiB v7x, 128 MiB v5e/v6e
    vmem_budget = max(vmem_cap // 2 - 8 * 2**20, 16 * 2**20)
    tm, working = _pick_tm(M, K, N, in_bytes, out_bytes, w_bytes, tm,
                           vmem_budget)
    vmem_limit = int(min(vmem_cap // 2, max(working + 8 * 2**20, 24 * 2**20)))
    grid = (pl.cdiv(M, tm),)

    cost = pl.CostEstimate(
        flops=2 * M * K * N + 8 * M * K,
        transcendentals=M,  # one rsqrt per row
        bytes_accessed=(M * K * in_bytes + K * N * w_bytes + N * 4
                        + M * N * out_bytes),
    )

    out = pl.pallas_call(
        _patch_merge_kernel,
        out_shape=jax.ShapeDtypeStruct((M, N), out_dtype),
        grid_spec=pltpu.PrefetchScalarGridSpec(
            num_scalar_prefetch=0,
            grid=grid,
            in_specs=[
                pl.BlockSpec((tm, K), lambda i: (i, 0)),
                # Constant blocks: index_map returns the same block every grid
                # step, so they are fetched once and stay resident in VMEM.
                pl.BlockSpec((K, N), lambda i: (0, 0)),
                pl.BlockSpec((1, N), lambda i: (0, 0)),
            ],
            out_specs=pl.BlockSpec((tm, N), lambda i: (i, 0)),
        ),
        compiler_params=pltpu.CompilerParams(
            dimension_semantics=("parallel",),
            vmem_limit_bytes=vmem_limit,
        ),
        cost_estimate=cost,
    )(merged, w_folded, bias_row)

    return out.reshape(B, L, N)


def reference_forward(x, gamma, beta, weight):
    """Pure-JAX f32 reference matching the PyTorch forward exactly."""
    B, C, H, W = x.shape
    xh = jnp.transpose(x, (0, 2, 3, 1))
    x0 = xh[:, 0::2, 0::2, :]
    x1 = xh[:, 1::2, 0::2, :]
    x2 = xh[:, 0::2, 1::2, :]
    x3 = xh[:, 1::2, 1::2, :]
    m = jnp.concatenate([x0, x1, x2, x3], axis=-1).reshape(B, -1, 4 * C)
    mean = jnp.mean(m, axis=-1, keepdims=True)
    var = jnp.mean((m - mean) ** 2, axis=-1, keepdims=True)
    mn = (m - mean) / jnp.sqrt(var + EPS) * gamma + beta
    return mn @ jnp.transpose(weight)


if __name__ == "__main__":
    # Small shapes consistent with the module: B=2, C=4, H=W=16.
    B, C, H, W = 2, 4, 16, 16
    key = jax.random.PRNGKey(0)
    kx, kw, kg, kb = jax.random.split(key, 4)

    x = jax.random.normal(kx, (B, C, H, W), dtype=jnp.float32)
    # nn.Linear(4C, 2C, bias=False).weight layout: (2C, 4C).
    weight = jax.random.normal(kw, (2 * C, 4 * C), dtype=jnp.float32) * 0.05
    gamma = 1.0 + 0.1 * jax.random.normal(kg, (4 * C,), dtype=jnp.float32)
    beta = 0.1 * jax.random.normal(kb, (4 * C,), dtype=jnp.float32)

    out = patch_merging_forward(x, gamma, beta, weight)
    out = jax.block_until_ready(out)

    ref = reference_forward(x, gamma, beta, weight)
    assert out.shape == (B, (H // 2) * (W // 2), 2 * C)
    # Merged activations + matmul operands run in bf16 (f32 LN stats and MXU
    # accumulation), so compare against the f32 reference with bf16 tolerance.
    max_err = float(jnp.max(jnp.abs(out - ref)))
    assert jnp.allclose(out, ref, atol=2e-2, rtol=2e-2), max_err

    print("KERNEL_OK")
</pallas_src>

<mosaic_0001>
module attributes {stable_mosaic.version = 11 : i64} {
  func.func @_patch_merge_kernel(%arg0: i32, %arg1: memref<64x16xbf16, #tpu.memory_space<vmem>>, %arg2: memref<16x8xbf16, #tpu.memory_space<vmem>>, %arg3: memref<1x8xf32, #tpu.memory_space<vmem>>, %arg4: memref<64x8xf32, #tpu.memory_space<vmem>>) attributes {dimension_semantics = [#tpu.dimension_semantics<parallel>], iteration_bounds = array<i64: 2>, scalar_prefetch = 0 : i64, scratch_operands = 0 : i64, tpu.core_type = #tpu.core_type<tc>, window_params = [{transform_indices = @transform_0, window_bounds = array<i64: 64, 16>}, {pipeline_mode = #tpu.pipeline_mode<synchronous>, transform_indices = @transform_1, window_bounds = array<i64: 16, 8>}, {pipeline_mode = #tpu.pipeline_mode<synchronous>, transform_indices = @transform_2, window_bounds = array<i64: 1, 8>}, {transform_indices = @transform_3, window_bounds = array<i64: 64, 8>}]} {
    %c0 = arith.constant 0 : index
    %c0_0 = arith.constant 0 : index
    %0 = vector.load %arg1[%c0, %c0_0] : memref<64x16xbf16, #tpu.memory_space<vmem>>, vector<64x16xbf16>
    %1 = arith.extf %0 : vector<64x16xbf16> to vector<64x16xf32>
    %cst = arith.constant dense<0.000000e+00> : vector<64xf32>
    %2 = vector.multi_reduction <add>, %1, %cst [1] : vector<64x16xf32> to vector<64xf32>
    %3 = vector.shape_cast %2 : vector<64xf32> to vector<64x1xf32>
    %cst_1 = arith.constant 6.250000e-02 : f32
    %4 = vector.broadcast %cst_1 : f32 to vector<64x1xf32>
    %5 = arith.mulf %3, %4 : vector<64x1xf32>
    %6 = arith.mulf %1, %1 : vector<64x16xf32>
    %cst_2 = arith.constant dense<0.000000e+00> : vector<64xf32>
    %7 = vector.multi_reduction <add>, %6, %cst_2 [1] : vector<64x16xf32> to vector<64xf32>
    %8 = vector.shape_cast %7 : vector<64xf32> to vector<64x1xf32>
    %cst_3 = arith.constant 6.250000e-02 : f32
    %9 = vector.broadcast %cst_3 : f32 to vector<64x1xf32>
    %10 = arith.mulf %8, %9 : vector<64x1xf32>
    %11 = arith.mulf %5, %5 : vector<64x1xf32>
    %12 = arith.subf %10, %11 : vector<64x1xf32>
    %cst_4 = arith.constant 0.000000e+00 : f32
    %13 = vector.broadcast %cst_4 : f32 to vector<64x1xf32>
    %14 = arith.maximumf %12, %13 : vector<64x1xf32>
    %15 = vector.broadcast %5 : vector<64x1xf32> to vector<64x16xf32>
    %16 = arith.subf %1, %15 : vector<64x16xf32>
    %cst_5 = arith.constant 6.100000e-05 : f32
    %17 = vector.broadcast %cst_5 : f32 to vector<64x1xf32>
    %18 = arith.addf %14, %17 : vector<64x1xf32>
    %19 = math.rsqrt %18 : vector<64x1xf32>
    %20 = vector.broadcast %19 : vector<64x1xf32> to vector<64x16xf32>
    %21 = arith.mulf %16, %20 : vector<64x16xf32>
    %22 = arith.truncf %21 : vector<64x16xf32> to vector<64x16xbf16>
    %c0_6 = arith.constant 0 : index
    %c0_7 = arith.constant 0 : index
    %23 = vector.load %arg2[%c0_6, %c0_7] : memref<16x8xbf16, #tpu.memory_space<vmem>>, vector<16x8xbf16>
    %cst_8 = arith.constant dense<0.000000e+00> : vector<64x8xf32>
    %24 = tpu.matmul %22, %23, %cst_8 {dimension_numbers = #tpu.dot_dimension_numbers<[1], [0], [0], [1], [0, 0, 1, 1], [], []>} : vector<64x16xbf16>, vector<16x8xbf16>, vector<64x8xf32> -> vector<64x8xf32>
    %c0_9 = arith.constant 0 : index
    %c0_10 = arith.constant 0 : index
    %25 = vector.load %arg3[%c0_9, %c0_10] : memref<1x8xf32, #tpu.memory_space<vmem>>, vector<1x8xf32>
    %26 = vector.broadcast %25 : vector<1x8xf32> to vector<64x8xf32>
    %27 = arith.addf %24, %26 : vector<64x8xf32>
    %c0_11 = arith.constant 0 : index
    %c0_12 = arith.constant 0 : index
    %28 = vector.load %arg4[%c0_11, %c0_12] : memref<64x8xf32, #tpu.memory_space<vmem>>, vector<64x8xf32>
    tpu.vector_store %arg4[%c0_11, %c0_12], %27 {strides = array<i32>} : memref<64x8xf32, #tpu.memory_space<vmem>>, vector<64x8xf32>,
    return
  }
  func.func @transform_0(%arg0: i32) -> (i32, i32) {
    %c0_i32 = arith.constant 0 : i32
    %c0_i32_0 = arith.constant 0 : i32
    return %arg0, %c0_i32 : i32, i32
  }
  func.func @transform_1(%arg0: i32) -> (i32, i32) {
    %c0_i32 = arith.constant 0 : i32
    %c0_i32_0 = arith.constant 0 : i32
    %c0_i32_1 = arith.constant 0 : i32
    return %c0_i32, %c0_i32_0 : i32, i32
  }
  func.func @transform_2(%arg0: i32) -> (i32, i32) {
    %c0_i32 = arith.constant 0 : i32
    %c0_i32_0 = arith.constant 0 : i32
    %c0_i32_1 = arith.constant 0 : i32
    return %c0_i32, %c0_i32_0 : i32, i32
  }
  func.func @transform_3(%arg0: i32) -> (i32, i32) {
    %c0_i32 = arith.constant 0 : i32
    %c0_i32_0 = arith.constant 0 : i32
    return %arg0, %c0_i32 : i32, i32
  }
}

</mosaic_0001>

<llo_original>
// kernel: patch_merging_forward.1
$region0: #{patch_merging_forward.1}
  #allocation0 [shape = 'u32[]', space=smem, size = 0x4, offset = 0x4, fixed_abs, tag = 'smem constant byte address 0x4 - core index']
  #allocation1 [shape = 'u32[144,128]{1,0:T(1,128)}', space=vmem, size = 0x12000, scoped, tag = 'internal scratch']
  %s0 = inlined_call_operand.vmem [shape: bf16[128,16], index: 0, kind: input, shape index: {}]
  %s1 = inlined_call_operand.vmem [shape: bf16[16,8], index: 1, kind: input, shape index: {}]
  %s2 = inlined_call_operand.vmem [shape: f32[1,8], index: 2, kind: input, shape index: {}]
  %s3 = inlined_call_operand.vmem [shape: f32[128,8], index: 3, kind: output, shape index: {}]
  %s4 = sld [smem:[#allocation0]]
  $region45: #{patch_merging_forward.1} parent=0
    _
  %s6 = ssub.s32 1, %s4
  %s7 = scalar_select 0, %s6, %s4
  loop: start=0, step=1, limit=4
  $region2: #{patch_merging_forward.1} parent=0 // loop_pre_header
    _
  $region3: #{patch_merging_forward.1} parent=0 // loop_header
    %s9 = sphi 0, %s13
    %p10 = scmp.ge.s32.totalorder %s9, 4
    %s19 = sphi 0, %s21
    %s22 = sphi 0, %s19
    %s23 = sphi 0, %s22
    %s39 = sphi 0, %s23
    %s43 = sphi 0, %s43
    %s45 = sphi 0, %s43
    %s46 = sphi 0, %s45
    %s60 = sphi 0, %s46
    %s64 = sphi 0, %s64
    %s66 = sphi 0, %s64
    %s67 = sphi 0, %s66
    %s81 = sphi 0, %s67
    %s87 = sphi 0, %s89
    %s90 = sphi 0, %s87
    %s91 = sphi 0, %s90
    %s107 = sphi 0, %s91
  $region4: #{patch_merging_forward.1} parent=0 // loop_header_branch
    %12 = sbr.rel (%p10) target = $region8
  $region5: #{patch_merging_forward.1} parent=0 // loop_body
    %s14 = ssub.s32 %s9, 1
    %s15 = ssub.s32 %s9, 2
    %s16 = sadd.s32 %s9, 1
    %s17 = ssub.s32 %s9, %s16
    %p18 = scmp.eq.s32.totalorder %s17, 0
    %s20 = sadd.s32 %s19, 1
    %s21 = scalar_select %p18, %s19, %s20
    %p24 = pneg %p18
    %p25 = scmp.eq.s32.totalorder %s9, 1
    %p26 = por %p24, %p25
    %p27 = scmp.ne.s32.totalorder %s19, %s22
    %p28 = scmp.eq.s32.totalorder %s9, 0
    %p29 = por %p27, %p28
    %p30 = scmp.ne.s32.totalorder %s19, %s22
    %p31 = scmp.eq.s32.totalorder %s14, 1
    %p32 = por %p30, %p31
    %p33 = scmp.ne.s32.totalorder %s22, %s23
    %p34 = scmp.eq.s32.totalorder %s14, 0
    %p35 = por %p33, %p34
    %p36 = scmp.ne.s32.totalorder %s22, %s23
    %p37 = scmp.eq.s32.totalorder %s15, 1
    %p38 = por %p36, %p37
    %p40 = scmp.ne.s32.totalorder %s23, %s39
    %p41 = scmp.eq.s32.totalorder %s15, 0
    %p42 = por %p40, %p41
    %s44 = sadd.s32 %s43, 1
    %p47 = scmp.eq.s32.totalorder %s9, 1
    %p48 = scmp.ne.s32.totalorder %s43, %s45
    %p49 = scmp.eq.s32.totalorder %s9, 0
    %p50 = por %p48, %p49
    %p51 = scmp.ne.s32.totalorder %s43, %s45
    %p52 = scmp.eq.s32.totalorder %s14, 1
    %p53 = por %p51, %p52
    %p54 = scmp.ne.s32.totalorder %s45, %s46
    %p55 = scmp.eq.s32.totalorder %s14, 0
    %p56 = por %p54, %p55
    %p57 = scmp.ne.s32.totalorder %s45, %s46
    %p58 = scmp.eq.s32.totalorder %s15, 1
    %p59 = por %p57, %p58
    %p61 = scmp.ne.s32.totalorder %s46, %s60
    %p62 = scmp.eq.s32.totalorder %s15, 0
    %p63 = por %p61, %p62
    %s65 = sadd.s32 %s64, 1
    %p68 = scmp.eq.s32.totalorder %s9, 1
    %p69 = scmp.ne.s32.totalorder %s64, %s66
    %p70 = scmp.eq.s32.totalorder %s9, 0
    %p71 = por %p69, %p70
    %p72 = scmp.ne.s32.totalorder %s64, %s66
    %p73 = scmp.eq.s32.totalorder %s14, 1
    %p74 = por %p72, %p73
    %p75 = scmp.ne.s32.totalorder %s66, %s67
    %p76 = scmp.eq.s32.totalorder %s14, 0
    %p77 = por %p75, %p76
    %p78 = scmp.ne.s32.totalorder %s66, %s67
    %p79 = scmp.eq.s32.totalorder %s15, 1
    %p80 = por %p78, %p79
    %p82 = scmp.ne.s32.totalorder %s67, %s81
    %p83 = scmp.eq.s32.totalorder %s15, 0
    %p84 = por %p82, %p83
    %s85 = ssub.s32 %s9, %s16
    %p86 = scmp.eq.s32.totalorder %s85, 0
    %s88 = sadd.s32 %s87, 1
    %s89 = scalar_select %p86, %s87, %s88
    %p92 = pneg %p86
    %p93 = scmp.eq.s32.totalorder %s9, 1
    %p94 = por %p92, %p93
    %p95 = scmp.ne.s32.totalorder %s87, %s90
    %p96 = scmp.eq.s32.totalorder %s9, 0
    %p97 = por %p95, %p96
    %p98 = scmp.ne.s32.totalorder %s87, %s90
    %p99 = scmp.eq.s32.totalorder %s14, 1
    %p100 = por %p98, %p99
    %p101 = scmp.ne.s32.totalorder %s90, %s91
    %p102 = scmp.eq.s32.totalorder %s14, 0
    %p103 = por %p101, %p102
    %p104 = scmp.ne.s32.totalorder %s90, %s91
    %p105 = scmp.eq.s32.totalorder %s15, 1
    %p106 = por %p104, %p105
    %p108 = scmp.ne.s32.totalorder %s91, %s107
    %p109 = scmp.eq.s32.totalorder %s15, 0
    %p110 = por %p108, %p109
    %p111 = scmp.le.s32.totalorder 1, %s9
    %p112 = scmp.lt.s32.totalorder %s9, 3
    %p113 = pnand %p111, %p112
    %p114 = pneg %p113
    // Predicated region
    $region9: #{patch_merging_forward.1} parent=5 // pred_check
      _
    $region10: #{patch_merging_forward.1} parent=5 // pred_check_branch
      %116 = sbr.rel (%p113) target = $region12
    $region11: #{patch_merging_forward.1} parent=5 // pred_region
      %s117 = ssub.s32 %s9, 1
      // Predicated region
      $region13: #{patch_merging_forward.1} parent=11 // pred_check
        %p118 = pneg %p56
      $region14: #{patch_merging_forward.1} parent=11 // pred_check_branch
        %120 = sbr.rel (%p118) target = $region16
      $region15: #{patch_merging_forward.1} parent=11 // pred_region
        _
      $region16: #{patch_merging_forward.1} parent=11 // pred_fallthru
        _
      // Predicated region
      $region17: #{patch_merging_forward.1} parent=11 // pred_check
        %p121 = pneg %p77
      $region18: #{patch_merging_forward.1} parent=11 // pred_check_branch
        %123 = sbr.rel (%p121) target = $region20
      $region19: #{patch_merging_forward.1} parent=11 // pred_region
        _
      $region20: #{patch_merging_forward.1} parent=11 // pred_fallthru
        _
    $region12: #{patch_merging_forward.1} parent=5 // pred_fallthru
      _
    %p124 = scmp.lt.s32.totalorder %s9, 2
    // Predicated region
    $region21: #{patch_merging_forward.1} parent=5 // pred_check
      %p125 = pneg %p124
    $region22: #{patch_merging_forward.1} parent=5 // pred_check_branch
      %127 = sbr.rel (%p125) target = $region24
    $region23: #{patch_merging_forward.1} parent=5 // pred_region
      // Predicated region
      $region25: #{patch_merging_forward.1} parent=23 // pred_check
        %p128 = pneg %p29
      $region26: #{patch_merging_forward.1} parent=23 // pred_check_branch
        %130 = sbr.rel (%p128) target = $region28
      $region27: #{patch_merging_forward.1} parent=23 // pred_region
        %s131 = smul.u32 8, %s9
        %p132 = scmp.lt.s32.totalorder %s131, 15
        %s133 = scalar_select %p132, %s131, 15
        %s134 = smul.addr %s133, 4
        %s135 = scalar_lea.vmem %s0, %s134
        %s136 = smul.u32 8, %s9
      $region28: #{patch_merging_forward.1} parent=23 // pred_fallthru
        _
    $region24: #{patch_merging_forward.1} parent=5 // pred_fallthru
      _
    %p137 = scmp.le.s32.totalorder 1, %s9
    %p138 = scmp.lt.s32.totalorder %s9, 3
    %p139 = pnand %p137, %p138
    %p140 = pneg %p139
    // Predicated region
    $region29: #{patch_merging_forward.1} parent=5 // pred_check
      _
    $region30: #{patch_merging_forward.1} parent=5 // pred_check_branch
      %142 = sbr.rel (%p139) target = $region32
    $region31: #{patch_merging_forward.1} parent=5 // pred_region
      %s143 = ssub.s32 %s9, 1
      %s144 = smul.u32 8, %s14
      %p145 = scmp.lt.s32.totalorder %s144, 15
      %s146 = scalar_select %p145, %s144, 15
      %s147 = smul.addr %s146, 4
      %s148 = scalar_lea.vmem %s0, %s147
      %p149 = pneg %p35
      %p150 = pneg %p32
      %p151 = pneg %p56
      %p152 = pneg %p53
      %p153 = pneg %p77
      %p154 = pneg %p74
      %p155 = pneg %p103
      %p156 = pneg %p100
      %s157 = smul.u32 8, %s14
      %p158 = scmp.lt.s32.totalorder %s157, 15
      %s159 = scalar_select %p158, %s157, 15
      %s160 = smul.addr %s159, 8
      %s161 = scalar_lea.vmem %s3, %s160
      %s162 = smul.u32 8, %s14
      %p163 = scmp.lt.s32.totalorder %s162, 15
      %s164 = scalar_select %p163, %s162, 15
      %s165 = smul.addr %s164, 4
      %s166 = scalar_lea.vmem %s0, %s165
      %s167 = smul.u32 8, %s14
      %s168 = smul.u32 8, %s14
      %p169 = scmp.lt.s32.totalorder %s168, 15
      %s170 = scalar_select %p169, %s168, 15
      %s171 = smul.addr %s170, 8
      %s172 = scalar_lea.vmem %s3, %s171
      %s173 = smul.u32 8, %s14
      %v175 = vld [vmem:[%s166] sm:$0xf]
      %v176 = vld [vmem:[%s166 + $0x4] sm:$0xf]
      %v177 = vld [vmem:[%s166 + $0x8] sm:$0xf]
      %v178 = vld [vmem:[%s166 + $0xc] sm:$0xf]
      %v179 = vld [vmem:[%s166 + $0x10] sm:$0xf]
      %v180 = vld [vmem:[%s166 + $0x14] sm:$0xf]
      %v181 = vld [vmem:[%s166 + $0x18] sm:$0xf]
      %v182 = vld [vmem:[%s166 + $0x1c] sm:$0xf]
      %v183 = vunpack.c.l.bf16 %v175
      %v184 = vunpack.c.l.bf16 %v176
      %v185 = vunpack.c.l.bf16 %v177
      %v186 = vunpack.c.l.bf16 %v178
      %v187 = vunpack.c.l.bf16 %v179
      %v188 = vunpack.c.l.bf16 %v180
      %v189 = vunpack.c.l.bf16 %v181
      %v190 = vunpack.c.l.bf16 %v182
      %vm191 = vcmask 130048
      %v192 = vsel %vm191, %v183, 0.0
      %193 = vadd.xlane.f32.xlu0 %v192
      %v194 = vpop.xlane.xlu0 %193
      %v195 = vsel %vm191, %v184, 0.0
      %196 = vadd.xlane.f32.xlu0 %v195
      %v197 = vpop.xlane.xlu0 %196
      %v198 = vsel %vm191, %v185, 0.0
      %199 = vadd.xlane.f32.xlu0 %v198
      %v200 = vpop.xlane.xlu0 %199
      %v201 = vsel %vm191, %v186, 0.0
      %202 = vadd.xlane.f32.xlu0 %v201
      %v203 = vpop.xlane.xlu0 %202
      %v204 = vsel %vm191, %v187, 0.0
      %205 = vadd.xlane.f32.xlu0 %v204
      %v206 = vpop.xlane.xlu0 %205
      %v207 = vsel %vm191, %v188, 0.0
      %208 = vadd.xlane.f32.xlu0 %v207
      %v209 = vpop.xlane.xlu0 %208
      %v210 = vsel %vm191, %v189, 0.0
      %211 = vadd.xlane.f32.xlu0 %v210
      %v212 = vpop.xlane.xlu0 %211
      %v213 = vsel %vm191, %v190, 0.0
      %214 = vadd.xlane.f32.xlu0 %v213
      %v215 = vpop.xlane.xlu0 %214
      %v216 = vmul.f32 %v194, 0.0625
      %v217 = vmul.f32 %v197, 0.0625
      %v218 = vmul.f32 %v200, 0.0625
      %v219 = vmul.f32 %v203, 0.0625
      %v220 = vmul.f32 %v206, 0.0625
      %v221 = vmul.f32 %v209, 0.0625
      %v222 = vmul.f32 %v212, 0.0625
      %v223 = vmul.f32 %v215, 0.0625
      %v224 = vmul.f32 %v183, %v183
      %v225 = vmul.f32 %v184, %v184
      %v226 = vmul.f32 %v185, %v185
      %v227 = vmul.f32 %v186, %v186
      %v228 = vmul.f32 %v187, %v187
      %v229 = vmul.f32 %v188, %v188
      %v230 = vmul.f32 %v189, %v189
      %v231 = vmul.f32 %v190, %v190
      %v232 = vsel %vm191, %v224, 0.0
      %233 = vadd.xlane.f32.xlu0 %v232
      %v234 = vpop.xlane.xlu0 %233
      %v235 = vsel %vm191, %v225, 0.0
      %236 = vadd.xlane.f32.xlu0 %v235
      %v237 = vpop.xlane.xlu0 %236
      %v238 = vsel %vm191, %v226, 0.0
      %239 = vadd.xlane.f32.xlu0 %v238
      %v240 = vpop.xlane.xlu0 %239
      %v241 = vsel %vm191, %v227, 0.0
      %242 = vadd.xlane.f32.xlu0 %v241
      %v243 = vpop.xlane.xlu0 %242
      %v244 = vsel %vm191, %v228, 0.0
      %245 = vadd.xlane.f32.xlu0 %v244
      %v246 = vpop.xlane.xlu0 %245
      %v247 = vsel %vm191, %v229, 0.0
      %248 = vadd.xlane.f32.xlu0 %v247
      %v249 = vpop.xlane.xlu0 %248
      %v250 = vsel %vm191, %v230, 0.0
      %251 = vadd.xlane.f32.xlu0 %v250
      %v252 = vpop.xlane.xlu0 %251
      %v253 = vsel %vm191, %v231, 0.0
      %254 = vadd.xlane.f32.xlu0 %v253
      %v255 = vpop.xlane.xlu0 %254
      %v256 = vmul.f32 %v234, 0.0625
      %v257 = vmul.f32 %v237, 0.0625
      %v258 = vmul.f32 %v240, 0.0625
      %v259 = vmul.f32 %v243, 0.0625
      %v260 = vmul.f32 %v246, 0.0625
      %v261 = vmul.f32 %v249, 0.0625
      %v262 = vmul.f32 %v252, 0.0625
      %v263 = vmul.f32 %v255, 0.0625
      %v264 = vmul.f32 %v216, %v216
      %v265 = vmul.f32 %v217, %v217
      %v266 = vmul.f32 %v218, %v218
      %v267 = vmul.f32 %v219, %v219
      %v268 = vmul.f32 %v220, %v220
      %v269 = vmul.f32 %v221, %v221
      %v270 = vmul.f32 %v222, %v222
      %v271 = vmul.f32 %v223, %v223
      %v272 = vsub.f32 %v256, %v264
      %v273 = vsub.f32 %v257, %v265
      %v274 = vsub.f32 %v258, %v266
      %v275 = vsub.f32 %v259, %v267
      %v276 = vsub.f32 %v260, %v268
      %v277 = vsub.f32 %v261, %v269
      %v278 = vsub.f32 %v262, %v270
      %v279 = vsub.f32 %v263, %v271
      %v280 = vmax.f32 %v272, 0.0
      %v281 = vmax.f32 %v273, 0.0
      %v282 = vmax.f32 %v274, 0.0
      %v283 = vmax.f32 %v275, 0.0
      %v284 = vmax.f32 %v276, 0.0
      %v285 = vmax.f32 %v277, 0.0
      %v286 = vmax.f32 %v278, 0.0
      %v287 = vmax.f32 %v279, 0.0
      %v288 = vsub.f32 %v183, %v216
      %v289 = vsub.f32 %v184, %v217
      %v290 = vsub.f32 %v185, %v218
      %v291 = vsub.f32 %v186, %v219
      %v292 = vsub.f32 %v187, %v220
      %v293 = vsub.f32 %v188, %v221
      %v294 = vsub.f32 %v189, %v222
      %v295 = vsub.f32 %v190, %v223
      %v296 = vadd.f32 %v280, 6.1e-05
      %v297 = vadd.f32 %v281, 6.1e-05
      %v298 = vadd.f32 %v282, 6.1e-05
      %v299 = vadd.f32 %v283, 6.1e-05
      %v300 = vadd.f32 %v284, 6.1e-05
      %v301 = vadd.f32 %v285, 6.1e-05
      %v302 = vadd.f32 %v286, 6.1e-05
      %v303 = vadd.f32 %v287, 6.1e-05
      %v304 = vrsqrt.pop %v296
      %v305 = vrsqrt.pop %v297
      %v306 = vrsqrt.pop %v298
      %v307 = vrsqrt.pop %v299
      %v308 = vrsqrt.pop %v300
      %v309 = vrsqrt.pop %v301
      %v310 = vrsqrt.pop %v302
      %v311 = vrsqrt.pop %v303
      %v312 = vmul.f32 %v288, %v304
      %v313 = vmul.f32 %v289, %v305
      %v314 = vmul.f32 %v290, %v306
      %v315 = vmul.f32 %v291, %v307
      %v316 = vmul.f32 %v292, %v308
      %v317 = vmul.f32 %v293, %v309
      %v318 = vmul.f32 %v294, %v310
      %v319 = vmul.f32 %v295, %v311
      %v320 = vpack.c.bf16 %v313, %v312
      %v321 = vpack.c.bf16 %v315, %v314
      %v322 = vpack.c.bf16 %v317, %v316
      %v323 = vpack.c.bf16 %v319, %v318
      %v324 = vld [vmem:[%s1] sm:$0xf]
      %v325 = vld [vmem:[%s1 + $0x4] sm:$0xf]
      %v326 = vld [vmem:[%s2] sm:$0x1]
      %v328 = vlaneseq
      %v329 = vshrl.u32 %v328, 7
      %v330 = vsub.s32 0, %v329
      %v331 = vrot.slane %v326, %v330
      %v335 = vunpack.c.l.b16 %v324
      %v336 = vunpack.c.l.b16 %v325
      %v337 = vpack.c.b16 %v336, %v335
      %v340 = vsel %vm191, %v320, 0
      %v343 = vsel %vm191, %v321, 0
      %v346 = vsel %vm191, %v322, 0
      %v349 = vsel %vm191, %v323, 0
      %351 = vmatprep.subr.bf16.mxu0 0
      %352 = vmatpush1.bf16.msra.mxu0 %v337
      %353 = vmatprep.subr.bf16.mxu0 0
      %354 = vmatpush1.bf16.msra.mxu0 0
      %355 = vmatprep.subr.bf16.mxu0 0
      %356 = vmatpush1.bf16.msra.mxu0 0
      %357 = vmatprep.subr.bf16.mxu0 0
      %358 = vmatpush1.bf16.msra.mxu0 0
      %359 = vmatprep.subr.bf16.mxu0 0
      %360 = vmatpush1.bf16.msra.mxu0 0
      %361 = vmatprep.subr.bf16.mxu0 0
      %362 = vmatpush1.bf16.msra.mxu0 0
      %363 = vmatprep.subr.bf16.mxu0 0
      %364 = vmatpush1.bf16.msra.mxu0 0
      %365 = vmatprep.subr.bf16.mxu0 0
      %366 = vmatpush1.bf16.msra.mxu0 0
      %367 = vmatprep.subr.bf16.mxu0 0
      %368 = vmatpush1.bf16.msra.mxu0 0
      %369 = vmatprep.subr.bf16.mxu0 0
      %370 = vmatpush1.bf16.msra.mxu0 0
      %371 = vmatprep.subr.bf16.mxu0 0
      %372 = vmatpush1.bf16.msra.mxu0 0
      %373 = vmatprep.subr.bf16.mxu0 0
      %374 = vmatpush1.bf16.msra.mxu0 0
      %375 = vmatprep.subr.bf16.mxu0 0
      %376 = vmatpush1.bf16.msra.mxu0 0
      %377 = vmatprep.subr.bf16.mxu0 0
      %378 = vmatpush1.bf16.msra.mxu0 0
      %379 = vmatprep.subr.bf16.mxu0 0
      %380 = vmatpush1.bf16.msra.mxu0 0
      %381 = vmatprep.subr.bf16.mxu0 0
      %382 = vmatpush1.bf16.msra.mxu0 0
      %383 = vmatprep.mubr.bf16.mxu0 0
      %384 = vmatmul.mubr.bf16.gmra.mrb[0].mxu0 %v340
      %v385 = vpop.f32.mrb[0].mxu0
      %v386 = vadd.f32 %v331, %v385
      %v387 = vpop.f32.mrb[0].mxu0
      %v388 = vpop.f32.mrb[0].mxu0
      %v389 = vadd.f32 %v331, %v388
      %v390 = vpop.f32.mrb[0].mxu0
      %391 = vmatprep.mubr.bf16.mxu0 0
      %392 = vmatmul.mubr.bf16.gmra.mrb[0].mxu0 %v343
      %v393 = vpop.f32.mrb[0].mxu0
      %v394 = vadd.f32 %v331, %v393
      %v395 = vpop.f32.mrb[0].mxu0
      %v396 = vpop.f32.mrb[0].mxu0
      %v397 = vadd.f32 %v331, %v396
      %v398 = vpop.f32.mrb[0].mxu0
      %399 = vmatprep.mubr.bf16.mxu0 0
      %400 = vmatmul.mubr.bf16.gmra.mrb[0].mxu0 %v346
      %v401 = vpop.f32.mrb[0].mxu0
      %v402 = vadd.f32 %v331, %v401
      %v403 = vpop.f32.mrb[0].mxu0
      %v404 = vpop.f32.mrb[0].mxu0
      %v405 = vadd.f32 %v331, %v404
      %v406 = vpop.f32.mrb[0].mxu0
      %407 = vmatprep.mubr.bf16.mxu0 0
      %408 = vmatmul.mubr.bf16.gmra.mrb[0].mxu0 %v349
      %v409 = vpop.f32.mrb[0].mxu0
      %v410 = vadd.f32 %v331, %v409
      %v411 = vpop.f32.mrb[0].mxu0
      %v412 = vpop.f32.mrb[0].mxu0
      %v413 = vadd.f32 %v331, %v412
      %v414 = vpop.f32.mrb[0].mxu0
      %415 = vdwg.mxu0
      %vm416 = vcmask 64512
      %417 = vst.msk [vmem:[%s172] sm:$0xff] %vm416, %v386
      %418 = vst.msk [vmem:[%s172 + $0x8] sm:$0xff] %vm416, %v389
      %419 = vst.msk [vmem:[%s172 + $0x10] sm:$0xff] %vm416, %v394
      %420 = vst.msk [vmem:[%s172 + $0x18] sm:$0xff] %vm416, %v397
      %421 = vst.msk [vmem:[%s172 + $0x20] sm:$0xff] %vm416, %v402
      %422 = vst.msk [vmem:[%s172 + $0x28] sm:$0xff] %vm416, %v405
      %423 = vst.msk [vmem:[%s172 + $0x30] sm:$0xff] %vm416, %v410
      %424 = vst.msk [vmem:[%s172 + $0x38] sm:$0xff] %vm416, %v413
      %s425 = smul.u32 8, %s14
      %p426 = scmp.lt.s32.totalorder %s425, 15
      %s427 = scalar_select %p426, %s425, 15
      %s428 = smul.addr %s427, 8
      %s429 = scalar_lea.vmem %s3, %s428
      // Predicated region
      $region33: #{patch_merging_forward.1} parent=31 // pred_check
        %p430 = pneg %p100
      $region34: #{patch_merging_forward.1} parent=31 // pred_check_branch
        %432 = sbr.rel (%p430) target = $region36
      $region35: #{patch_merging_forward.1} parent=31 // pred_region
        %s433 = smul.u32 8, %s14
      $region36: #{patch_merging_forward.1} parent=31 // pred_fallthru
        _
    $region32: #{patch_merging_forward.1} parent=5 // pred_fallthru
      _
    %p434 = scmp.le.s32.totalorder 2, %s9
    // Predicated region
    $region37: #{patch_merging_forward.1} parent=5 // pred_check
      %p435 = pneg %p434
    $region38: #{patch_merging_forward.1} parent=5 // pred_check_branch
      %437 = sbr.rel (%p435) target = $region40
    $region39: #{patch_merging_forward.1} parent=5 // pred_region
      %s438 = ssub.s32 %s9, 2
      // Predicated region
      $region41: #{patch_merging_forward.1} parent=39 // pred_check
        %p439 = pneg %p106
      $region42: #{patch_merging_forward.1} parent=39 // pred_check_branch
        %441 = sbr.rel (%p439) target = $region44
      $region43: #{patch_merging_forward.1} parent=39 // pred_region
        %s442 = smul.u32 8, %s15
        %p443 = scmp.lt.s32.totalorder %s442, 15
        %s444 = scalar_select %p443, %s442, 15
        %s445 = smul.addr %s444, 8
        %s446 = scalar_lea.vmem %s3, %s445
      $region44: #{patch_merging_forward.1} parent=39 // pred_fallthru
        _
    $region40: #{patch_merging_forward.1} parent=5 // pred_fallthru
      _
  $region6: #{patch_merging_forward.1} parent=0 // loop_footer
    %s13 = sadd.s32 1, %s9
  $region7: #{patch_merging_forward.1} parent=0 // loop_footer_branch
    %8 = sbr.rel target = $region3
  $region8: #{patch_merging_forward.1} parent=0 // loop_exit
    _

</llo_original>
